<compile_context>
chip_gen: v7x
topology: tpu7x:2x2x1
jax: 0.10.0
libtpu: 0.0.40
codegen_flags: <defaults>
</compile_context>

<pallas_src>
from typing import NamedTuple

import jax
import jax.numpy as jnp
from jax.experimental import pallas as pl
from jax.experimental.pallas import tpu as pltpu


def _round_up(x, m):
    return ((x + m - 1) // m) * m


# --------------------------------------------------------------------------- #
# Kernel
# --------------------------------------------------------------------------- #
def _iclassifier_kernel(x_ref, w_feat_ref, b_feat_ref, w_fc_ref, b_fc_ref,
                        feats_ref, c_ref, acc_ref):
    # Grid: (i = B-tile, k = K-tile of the contraction dim D).
    #   x_ref:      [Bt, Kt]   compute-dtype input tile
    #   w_feat_ref: [Kt, Fp]   feature_extractor weight tile (resident if nk==1)
    #   b_feat_ref: [1,  Fp]   f32 bias (resident)
    #   w_fc_ref:   [Fp, Op]   fc weight, pre-transposed to [in, out] (resident)
    #   b_fc_ref:   [1,  Op]   f32 bias (resident)
    #   feats_ref:  [Bt, Fp]   output: feats.view(B, -1) (padded)
    #   c_ref:      [Bt, Op]   output: fc(feats)         (padded)
    #   acc_ref:    [Bt, Fp]   f32 accumulator scratch
    k = pl.program_id(1)
    nk = pl.num_programs(1)

    # feature_extractor: K-tiled MXU matmul, f32 accumulation.
    p_acc = jnp.dot(x_ref[...], w_feat_ref[...],
                    preferred_element_type=jnp.float32)

    @pl.when(k == 0)
    def _():
        acc_ref[...] = p_acc          # assign (no zero-init store + reload)

    @pl.when(k > 0)
    def _():
        acc_ref[...] += p_acc

    @pl.when(k == nk - 1)
    def _():
        feats = acc_ref[...] + b_feat_ref[...]            # f32 [Bt, Fp]
        feats_ref[...] = feats.astype(feats_ref.dtype)
        # fc: canonical [M,K]x[K,N] MXU matmul (w_fc pre-transposed in wrapper).
        c = jnp.dot(feats.astype(w_fc_ref.dtype), w_fc_ref[...],
                    preferred_element_type=jnp.float32)
        c_ref[...] = (c + b_fc_ref[...]).astype(c_ref.dtype)


# --------------------------------------------------------------------------- #
# Planning (static tiling / padding / VMEM budget)
# --------------------------------------------------------------------------- #
class _Plan(NamedTuple):
    B: int; D: int; F: int; O: int
    Bp: int; Dp: int; Fp: int; Op: int
    Bt: int; Kt: int; nb: int; nk: int
    compute_dtype: object
    feats_dtype: object
    c_dtype: object
    vmem_limit: int


def _vmem_bytes(Bt, Kt, Fp, Op, cdb, fdb, odb):
    # Conservative: every pipelined block counted double-buffered.
    return (2 * (Bt * Kt * cdb          # x blocks
                 + Kt * Fp * cdb        # w_feat blocks
                 + Fp * 4 + Op * 4      # biases
                 + Fp * Op * cdb        # w_fc (resident)
                 + Bt * Fp * fdb        # feats out blocks
                 + Bt * Op * odb)       # c out blocks
            + Bt * Fp * 4)              # f32 accumulator scratch


def make_plan(B, D, F, O, *, compute_dtype=jnp.bfloat16,
              feats_dtype=jnp.float32, c_dtype=jnp.float32,
              b_tile=256, k_tile=2048):
    cdb = jnp.dtype(compute_dtype).itemsize
    fdb = jnp.dtype(feats_dtype).itemsize
    odb = jnp.dtype(c_dtype).itemsize
    sublane = max(8, 32 // cdb)                      # 8 for f32, 16 for bf16

    Fp = _round_up(F, 128)                           # lane-dense feats output
    Op = _round_up(O, 128)                           # lane-dense logits output

    # Generation-aware VMEM budget (v5e/v6e 128 MiB, v7x 64 MiB per TC).
    try:
        vmem_cap = int(pltpu.get_tpu_info().vmem_capacity_bytes)
    except Exception:
        vmem_cap = 64 << 20                          # conservative (v7x) fallback
    budget = int(0.7 * vmem_cap)

    # --- B tile: sublane multiple, prefer nb >= 2 so v7x megacore has work ---
    Bp0 = _round_up(B, sublane)
    b_tile = _round_up(max(b_tile, sublane), sublane)
    if Bp0 <= sublane:
        Bt = Bp0                                     # tiny batch: single tile
    elif Bp0 <= 2 * b_tile:
        Bt = _round_up((Bp0 + 1) // 2, sublane)      # exactly 2 B-tiles
    else:
        Bt = b_tile
    Bp = _round_up(Bp0, Bt)
    nb = Bp // Bt

    # --- K tile: prefer full w_feat residency (nk == 1 -> DMA'd exactly once
    #     for the whole call); otherwise the largest 128-multiple that fits. ---
    Dp128 = _round_up(D, 128)
    k_cap = _round_up(max(min(k_tile, Dp128), 128), 128)
    candidates = [Dp128] + [kt for kt in (2048, 1024, 512, 256, 128)
                            if kt <= min(k_cap, Dp128)]
    Kt = 128
    for kt in candidates:
        if _vmem_bytes(Bt, kt, Fp, Op, cdb, fdb, odb) <= budget:
            Kt = kt
            break
    Dp = _round_up(D, Kt)
    nk = Dp // Kt

    est = _vmem_bytes(Bt, Kt, Fp, Op, cdb, fdb, odb)
    vmem_limit = int(min(max(2 * est, 8 << 20), int(0.9 * vmem_cap)))

    return _Plan(B, D, F, O, Bp, Dp, Fp, Op, Bt, Kt, nb, nk,
                 compute_dtype, feats_dtype, c_dtype, vmem_limit)


# --------------------------------------------------------------------------- #
# One-time parameter preparation (hoisted out of the per-call path)
# --------------------------------------------------------------------------- #
def prepare_iclassifier_params(plan, w_feat, b_feat, w_fc, b_fc):
    cd = plan.compute_dtype
    D, F, O = plan.D, plan.F, plan.O
    Dp, Fp, Op = plan.Dp, plan.Fp, plan.Op
    w_feat_p = jnp.zeros((Dp, Fp), cd).at[:D, :F].set(w_feat.astype(cd))
    b_feat_p = jnp.zeros((1, Fp), jnp.float32).at[0, :F].set(
        b_feat.astype(jnp.float32))
    # Pre-transpose fc weight once: [O, F] -> [Fp, Op] (canonical MXU layout).
    w_fc_p = jnp.zeros((Fp, Op), cd).at[:F, :O].set(w_fc.T.astype(cd))
    b_fc_p = jnp.zeros((1, Op), jnp.float32).at[0, :O].set(
        b_fc.astype(jnp.float32))
    return w_feat_p, b_feat_p, w_fc_p, b_fc_p


# --------------------------------------------------------------------------- #
# Forward
# --------------------------------------------------------------------------- #
def iclassifier_forward(plan, params, x):
    """x: [B, C, H, W] (NCHW). Returns (feats_flat [B, F], logits [B, O])."""
    w_feat_p, b_feat_p, w_fc_p, b_fc_p = params
    B, D, F, O = plan.B, plan.D, plan.F, plan.O
    Bp, Dp, Fp, Op = plan.Bp, plan.Dp, plan.Fp, plan.Op
    Bt, Kt, nb, nk = plan.Bt, plan.Kt, plan.nb, plan.nk
    cd = plan.compute_dtype
    cdb = jnp.dtype(cd).itemsize

    x_flat = x.reshape(B, -1)                  # glue: flatten NCHW == .view(B,-1)
    if (B, D) == (Bp, Dp):
        xp = x_flat.astype(cd)                 # aligned: no padding pass at all
    else:
        xp = jnp.zeros((Bp, Dp), cd).at[:B, :D].set(x_flat.astype(cd))

    # Accurate HBM traffic estimate: w_feat streams once when resident (nk==1),
    # else once per B-tile.
    w_feat_streams = 1 if nk == 1 else nb
    cost = pl.CostEstimate(
        flops=2 * Bp * Dp * Fp + 2 * Bp * Fp * Op,
        transcendentals=0,
        bytes_accessed=(Bp * Dp * cdb
                        + w_feat_streams * Dp * Fp * cdb
                        + Fp * Op * cdb + Fp * 4 + Op * 4
                        + Bp * Fp * jnp.dtype(plan.feats_dtype).itemsize
                        + Bp * Op * jnp.dtype(plan.c_dtype).itemsize),
    )

    feats_p, c_p = pl.pallas_call(
        _iclassifier_kernel,
        out_shape=(
            jax.ShapeDtypeStruct((Bp, Fp), plan.feats_dtype),
            jax.ShapeDtypeStruct((Bp, Op), plan.c_dtype),
        ),
        grid_spec=pltpu.PrefetchScalarGridSpec(
            num_scalar_prefetch=0,
            grid=(nb, nk),
            in_specs=[
                pl.BlockSpec((Bt, Kt), lambda i, k: (i, k)),   # x
                pl.BlockSpec((Kt, Fp), lambda i, k: (k, 0)),   # w_feat (resident if nk==1)
                pl.BlockSpec((1, Fp), lambda i, k: (0, 0)),    # b_feat (resident)
                pl.BlockSpec((Fp, Op), lambda i, k: (0, 0)),   # w_fc   (resident, [F,O])
                pl.BlockSpec((1, Op), lambda i, k: (0, 0)),    # b_fc   (resident)
            ],
            out_specs=[
                pl.BlockSpec((Bt, Fp), lambda i, k: (i, 0)),   # feats (acc. across k)
                pl.BlockSpec((Bt, Op), lambda i, k: (i, 0)),   # c
            ],
            scratch_shapes=[pltpu.VMEM((Bt, Fp), jnp.float32)],
        ),
        compiler_params=pltpu.CompilerParams(
            dimension_semantics=("parallel", "arbitrary"),
            vmem_limit_bytes=plan.vmem_limit,
        ),
        cost_estimate=cost,
    )(xp, w_feat_p, b_feat_p, w_fc_p, b_fc_p)

    feats = feats_p if (Bp, Fp) == (B, F) else feats_p[:B, :F]
    c = c_p if (Bp, Op) == (B, O) else c_p[:B, :O]
    return feats, c


# --------------------------------------------------------------------------- #
# Demo / correctness check
# --------------------------------------------------------------------------- #
if __name__ == "__main__":
    # Small shapes consistent with the module.
    B, C, H, W = 2, 4, 16, 16
    feature_size = 32
    output_class = 8
    D = C * H * W

    key = jax.random.PRNGKey(0)
    kx, kwf, kbf, kwc, kbc = jax.random.split(key, 5)

    x = jax.random.normal(kx, (B, C, H, W), dtype=jnp.float32)

    # Deterministic synthetic parameters (no checkpoint loading).
    w_feat = jax.random.normal(kwf, (D, feature_size), dtype=jnp.float32) * 0.02
    b_feat = jax.random.normal(kbf, (feature_size,), dtype=jnp.float32) * 0.02
    w_fc = jax.random.normal(kwc, (output_class, feature_size), dtype=jnp.float32) * 0.02
    b_fc = jax.random.normal(kbc, (output_class,), dtype=jnp.float32) * 0.02

    # Static plan + one-time (hoisted) padded/cast/transposed weights.
    plan = make_plan(B, D, feature_size, output_class,
                     compute_dtype=jnp.bfloat16,       # f32 also supported for parity
                     feats_dtype=jnp.float32, c_dtype=jnp.float32)
    params = prepare_iclassifier_params(plan, w_feat, b_feat, w_fc, b_fc)
    params = jax.block_until_ready(params)

    fwd = jax.jit(lambda p, xx: iclassifier_forward(plan, p, xx))
    feats, logits = fwd(params, x)
    jax.block_until_ready((feats, logits))

    # Reference 1: same precision path (bf16 operands, f32 accumulation) — tight.
    x_flat = x.reshape(B, -1)
    cdt = jnp.bfloat16
    feats_ref = jnp.dot(x_flat.astype(cdt), w_feat.astype(cdt),
                        preferred_element_type=jnp.float32) + b_feat
    logits_ref = jnp.dot(feats_ref.astype(cdt), w_fc.T.astype(cdt),
                         preferred_element_type=jnp.float32) + b_fc
    assert jnp.allclose(feats, feats_ref, atol=2e-3, rtol=2e-3), "feats mismatch (bf16 ref)"
    assert jnp.allclose(logits, logits_ref, atol=2e-3, rtol=2e-3), "logits mismatch (bf16 ref)"

    # Reference 2: full-f32 PyTorch semantics — loose (bf16 compute path).
    feats_f32 = x_flat @ w_feat + b_feat
    logits_f32 = feats_f32 @ w_fc.T + b_fc
    assert jnp.allclose(feats, feats_f32, atol=5e-2, rtol=5e-2), "feats mismatch (f32 ref)"
    assert jnp.allclose(logits, logits_f32, atol=5e-2, rtol=5e-2), "logits mismatch (f32 ref)"

    assert feats.shape == (B, feature_size) and logits.shape == (B, output_class)
    print("KERNEL_OK")
</pallas_src>

<mosaic_0001>
module attributes {stable_mosaic.version = 11 : i64} {
  func.func @_iclassifier_kernel(%arg0: i32, %arg1: i32, %arg2: memref<16x1024xbf16, #tpu.memory_space<vmem>>, %arg3: memref<1024x128xbf16, #tpu.memory_space<vmem>>, %arg4: memref<1x128xf32, #tpu.memory_space<vmem>>, %arg5: memref<128x128xbf16, #tpu.memory_space<vmem>>, %arg6: memref<1x128xf32, #tpu.memory_space<vmem>>, %arg7: memref<16x128xf32, #tpu.memory_space<vmem>>, %arg8: memref<16x128xf32, #tpu.memory_space<vmem>>, %arg9: memref<16x128xf32, #tpu.memory_space<vmem>>) attributes {dimension_semantics = [#tpu.dimension_semantics<parallel>, #tpu.dimension_semantics<arbitrary>], iteration_bounds = array<i64: 1, 1>, scalar_prefetch = 0 : i64, scratch_operands = 1 : i64, tpu.core_type = #tpu.core_type<tc>, window_params = [{transform_indices = @transform_0, window_bounds = array<i64: 16, 1024>}, {transform_indices = @transform_1, window_bounds = array<i64: 1024, 128>}, {pipeline_mode = #tpu.pipeline_mode<synchronous>, transform_indices = @transform_2, window_bounds = array<i64: 1, 128>}, {pipeline_mode = #tpu.pipeline_mode<synchronous>, transform_indices = @transform_3, window_bounds = array<i64: 128, 128>}, {pipeline_mode = #tpu.pipeline_mode<synchronous>, transform_indices = @transform_4, window_bounds = array<i64: 1, 128>}, {transform_indices = @transform_5, window_bounds = array<i64: 16, 128>}, {transform_indices = @transform_6, window_bounds = array<i64: 16, 128>}]} {
    %c0 = arith.constant 0 : index
    %c0_0 = arith.constant 0 : index
    %0 = vector.load %arg2[%c0, %c0_0] : memref<16x1024xbf16, #tpu.memory_space<vmem>>, vector<16x1024xbf16>
    %c0_1 = arith.constant 0 : index
    %c0_2 = arith.constant 0 : index
    %1 = vector.load %arg3[%c0_1, %c0_2] : memref<1024x128xbf16, #tpu.memory_space<vmem>>, vector<1024x128xbf16>
    %cst = arith.constant dense<0.000000e+00> : vector<16x128xf32>
    %2 = tpu.matmul %0, %1, %cst {dimension_numbers = #tpu.dot_dimension_numbers<[1], [0], [0], [1], [0, 0, 1, 1], [], []>} : vector<16x1024xbf16>, vector<1024x128xbf16>, vector<16x128xf32> -> vector<16x128xf32>
    %c0_i32 = arith.constant 0 : i32
    %3 = arith.cmpi eq, %arg1, %c0_i32 : i32
    %4 = arith.extui %3 : i1 to i32
    %c0_i32_3 = arith.constant 0 : i32
    %5 = arith.cmpi ne, %4, %c0_i32_3 : i32
    scf.if %5 {
      %c0_8 = arith.constant 0 : index
      %c0_9 = arith.constant 0 : index
      %12 = vector.load %arg9[%c0_8, %c0_9] : memref<16x128xf32, #tpu.memory_space<vmem>>, vector<16x128xf32>
      tpu.vector_store %arg9[%c0_8, %c0_9], %2 {strides = array<i32>} : memref<16x128xf32, #tpu.memory_space<vmem>>, vector<16x128xf32>,
    } else {
    }
    %c0_i32_4 = arith.constant 0 : i32
    %6 = arith.cmpi sgt, %arg1, %c0_i32_4 : i32
    %7 = arith.extui %6 : i1 to i32
    %c0_i32_5 = arith.constant 0 : i32
    %8 = arith.cmpi ne, %7, %c0_i32_5 : i32
    scf.if %8 {
      %c0_8 = arith.constant 0 : index
      %c0_9 = arith.constant 0 : index
      %12 = vector.load %arg9[%c0_8, %c0_9] : memref<16x128xf32, #tpu.memory_space<vmem>>, vector<16x128xf32>
      %13 = arith.addf %12, %2 : vector<16x128xf32>
      %c0_10 = arith.constant 0 : index
      %c0_11 = arith.constant 0 : index
      %14 = vector.load %arg9[%c0_10, %c0_11] : memref<16x128xf32, #tpu.memory_space<vmem>>, vector<16x128xf32>
      tpu.vector_store %arg9[%c0_10, %c0_11], %13 {strides = array<i32>} : memref<16x128xf32, #tpu.memory_space<vmem>>, vector<16x128xf32>,
    } else {
    }
    %c0_i32_6 = arith.constant 0 : i32
    %9 = arith.cmpi eq, %arg1, %c0_i32_6 : i32
    %10 = arith.extui %9 : i1 to i32
    %c0_i32_7 = arith.constant 0 : i32
    %11 = arith.cmpi ne, %10, %c0_i32_7 : i32
    scf.if %11 {
      %c0_8 = arith.constant 0 : index
      %c0_9 = arith.constant 0 : index
      %12 = vector.load %arg9[%c0_8, %c0_9] : memref<16x128xf32, #tpu.memory_space<vmem>>, vector<16x128xf32>
      %c0_10 = arith.constant 0 : index
      %c0_11 = arith.constant 0 : index
      %13 = vector.load %arg4[%c0_10, %c0_11] : memref<1x128xf32, #tpu.memory_space<vmem>>, vector<1x128xf32>
      %14 = vector.broadcast %13 : vector<1x128xf32> to vector<16x128xf32>
      %15 = arith.addf %12, %14 : vector<16x128xf32>
      %c0_12 = arith.constant 0 : index
      %c0_13 = arith.constant 0 : index
      %16 = vector.load %arg7[%c0_12, %c0_13] : memref<16x128xf32, #tpu.memory_space<vmem>>, vector<16x128xf32>
      tpu.vector_store %arg7[%c0_12, %c0_13], %15 {strides = array<i32>} : memref<16x128xf32, #tpu.memory_space<vmem>>, vector<16x128xf32>,
      %17 = arith.truncf %15 : vector<16x128xf32> to vector<16x128xbf16>
      %c0_14 = arith.constant 0 : index
      %c0_15 = arith.constant 0 : index
      %18 = vector.load %arg5[%c0_14, %c0_15] : memref<128x128xbf16, #tpu.memory_space<vmem>>, vector<128x128xbf16>
      %cst_16 = arith.constant dense<0.000000e+00> : vector<16x128xf32>
      %19 = tpu.matmul %17, %18, %cst_16 {dimension_numbers = #tpu.dot_dimension_numbers<[1], [0], [0], [1], [0, 0, 1, 1], [], []>} : vector<16x128xbf16>, vector<128x128xbf16>, vector<16x128xf32> -> vector<16x128xf32>
      %c0_17 = arith.constant 0 : index
      %c0_18 = arith.constant 0 : index
      %20 = vector.load %arg6[%c0_17, %c0_18] : memref<1x128xf32, #tpu.memory_space<vmem>>, vector<1x128xf32>
      %21 = vector.broadcast %20 : vector<1x128xf32> to vector<16x128xf32>
      %22 = arith.addf %19, %21 : vector<16x128xf32>
      %c0_19 = arith.constant 0 : index
      %c0_20 = arith.constant 0 : index
      %23 = vector.load %arg8[%c0_19, %c0_20] : memref<16x128xf32, #tpu.memory_space<vmem>>, vector<16x128xf32>
      tpu.vector_store %arg8[%c0_19, %c0_20], %22 {strides = array<i32>} : memref<16x128xf32, #tpu.memory_space<vmem>>, vector<16x128xf32>,
    } else {
    }
    return
  }
  func.func @transform_0(%arg0: i32, %arg1: i32) -> (i32, i32) {
    %c0_i32 = arith.constant 0 : i32
    return %arg0, %arg1 : i32, i32
  }
  func.func @transform_1(%arg0: i32, %arg1: i32) -> (i32, i32) {
    %c0_i32 = arith.constant 0 : i32
    %c0_i32_0 = arith.constant 0 : i32
    return %arg1, %c0_i32 : i32, i32
  }
  func.func @transform_2(%arg0: i32, %arg1: i32) -> (i32, i32) {
    %c0_i32 = arith.constant 0 : i32
    %c0_i32_0 = arith.constant 0 : i32
    %c0_i32_1 = arith.constant 0 : i32
    return %c0_i32, %c0_i32_0 : i32, i32
  }
  func.func @transform_3(%arg0: i32, %arg1: i32) -> (i32, i32) {
    %c0_i32 = arith.constant 0 : i32
    %c0_i32_0 = arith.constant 0 : i32
    %c0_i32_1 = arith.constant 0 : i32
    return %c0_i32, %c0_i32_0 : i32, i32
  }
  func.func @transform_4(%arg0: i32, %arg1: i32) -> (i32, i32) {
    %c0_i32 = arith.constant 0 : i32
    %c0_i32_0 = arith.constant 0 : i32
    %c0_i32_1 = arith.constant 0 : i32
    return %c0_i32, %c0_i32_0 : i32, i32
  }
  func.func @transform_5(%arg0: i32, %arg1: i32) -> (i32, i32) {
    %c0_i32 = arith.constant 0 : i32
    %c0_i32_0 = arith.constant 0 : i32
    return %arg0, %c0_i32 : i32, i32
  }
  func.func @transform_6(%arg0: i32, %arg1: i32) -> (i32, i32) {
    %c0_i32 = arith.constant 0 : i32
    %c0_i32_0 = arith.constant 0 : i32
    return %arg0, %c0_i32 : i32, i32
  }
}

</mosaic_0001>

<llo_original>
// kernel: _lambda_.1
$region0: #{_lambda_.1}
  #allocation0 [shape = 'u32[]', space=smem, size = 0x4, offset = 0x4, fixed_abs, tag = 'smem constant byte address 0x4 - core index']
  #allocation1 [shape = 'u32[144,128]{1,0:T(1,128)}', space=vmem, size = 0x12000, scoped, tag = 'internal scratch']
  #allocation2 [shape = 'f32[16,128]{1,0:T(8,128)}', space=vmem, size = 0x2000, scoped, tag = 'scratch operand']
  %s0 = inlined_call_operand.vmem [shape: bf16[16,1024], index: 0, kind: input, shape index: {}]
  %s1 = inlined_call_operand.hbm [shape: bf16[1024,128], index: 1, kind: input, shape index: {}]
  %s2 = inlined_call_operand.vmem [shape: f32[1,128], index: 2, kind: input, shape index: {}]
  %s3 = inlined_call_operand.vmem [shape: bf16[128,128], index: 3, kind: input, shape index: {}]
  %s4 = inlined_call_operand.vmem [shape: f32[1,128], index: 4, kind: input, shape index: {}]
  %s5 = inlined_call_operand.vmem [shape: f32[16,128], index: 5, kind: output, shape index: {0}]
  %s6 = inlined_call_operand.vmem [shape: f32[16,128], index: 6, kind: output, shape index: {1}]
  %7 = xla_tuple %s5, %s6
  %s8 = sld [smem:[#allocation0]]
  $region54: #{_lambda_.1} parent=0
    _
  %s10 = ssub.s32 1, %s8
  %s11 = scalar_select 0, %s10, %s8
  $region1: #{_lambda_.1} parent=0
    #allocation3 [shape = 'u8[262144]{0}', space=vmem, size = 0x40000, scoped, tag = 'input window, operand 1, single buffered']
    #allocation4 [shape = 's32[1]{0}', space=sflag, size = 0x4, scoped, tag = 'scoped memory for _lambda_.1']
    %12 = vsyncpa [#allocation4], 0
    // Predicated region
    $region2: #{_lambda_.1} parent=1 // pred_check
      _
    $region3: #{_lambda_.1} parent=1 // pred_check_branch
      %14 = sbr.rel (0) target = $region5
    $region4: #{_lambda_.1} parent=1 // pred_region
      _
    $region5: #{_lambda_.1} parent=1 // pred_fallthru
      _
    // Predicated region
    $region6: #{_lambda_.1} parent=1 // pred_check
      _
    $region7: #{_lambda_.1} parent=1 // pred_check_branch
      %16 = sbr.rel (0) target = $region9
    $region8: #{_lambda_.1} parent=1 // pred_region
      %s18 = ssub.s32 8192, 8192
      %19 = vsyncadd [#allocation4], %s18
      %s20 = sshll.u32 [#allocation3], 4
      %s21 = int_to_ptr.vmem [resolvable:$true] %s20
      %26 = dma.hbm_to_vmem [thread:$0]  %s1, 8192, %s21, [#allocation4], 64, 64, 4
    $region9: #{_lambda_.1} parent=1 // pred_fallthru
      _
    // Predicated region
    $region10: #{_lambda_.1} parent=1 // pred_check
      _
    $region11: #{_lambda_.1} parent=1 // pred_check_branch
      %28 = sbr.rel (0) target = $region13
    $region12: #{_lambda_.1} parent=1 // pred_region
      _
    $region13: #{_lambda_.1} parent=1 // pred_fallthru
      _
    // Predicated region
    $region14: #{_lambda_.1} parent=1 // pred_check
      _
    $region15: #{_lambda_.1} parent=1 // pred_check_branch
      %30 = sbr.rel (0) target = $region17
    $region16: #{_lambda_.1} parent=1 // pred_region
      _
    $region17: #{_lambda_.1} parent=1 // pred_fallthru
      _
    // Predicated region
    $region18: #{_lambda_.1} parent=1 // pred_check
      _
    $region19: #{_lambda_.1} parent=1 // pred_check_branch
      %32 = sbr.rel (0) target = $region21
    $region20: #{_lambda_.1} parent=1 // pred_region
      _
    $region21: #{_lambda_.1} parent=1 // pred_fallthru
      _
    // Predicated region
    $region22: #{_lambda_.1} parent=1 // pred_check
      _
    $region23: #{_lambda_.1} parent=1 // pred_check_branch
      %34 = sbr.rel (0) target = $region25
    $region24: #{_lambda_.1} parent=1 // pred_region
      %35 = dma.done [#allocation4], 8192
    $region25: #{_lambda_.1} parent=1 // pred_fallthru
      _
    %v37 = vld [vmem:[%s0] sm:$0xff]
    %v38 = vld [vmem:[%s0 + $0x8] sm:$0xff]
    %v39 = vld [vmem:[%s0 + $0x10] sm:$0xff]
    %v40 = vld [vmem:[%s0 + $0x18] sm:$0xff]
    %v41 = vld [vmem:[%s0 + $0x20] sm:$0xff]
    %v42 = vld [vmem:[%s0 + $0x28] sm:$0xff]
    %v43 = vld [vmem:[%s0 + $0x30] sm:$0xff]
    %v44 = vld [vmem:[%s0 + $0x38] sm:$0xff]
    %v45 = vld [vmem:[#allocation3] sm:$0xf]
    %v46 = vld [vmem:[#allocation3 + $0x4] sm:$0xf]
    %v47 = vld [vmem:[#allocation3 + $0x8] sm:$0xf]
    %v48 = vld [vmem:[#allocation3 + $0xc] sm:$0xf]
    %v49 = vld [vmem:[#allocation3 + $0x10] sm:$0xf]
    %v50 = vld [vmem:[#allocation3 + $0x14] sm:$0xf]
    %v51 = vld [vmem:[#allocation3 + $0x18] sm:$0xf]
    %v52 = vld [vmem:[#allocation3 + $0x1c] sm:$0xf]
    %v53 = vld [vmem:[#allocation3 + $0x20] sm:$0xf]
    %v54 = vld [vmem:[#allocation3 + $0x24] sm:$0xf]
    %v55 = vld [vmem:[#allocation3 + $0x28] sm:$0xf]
    %v56 = vld [vmem:[#allocation3 + $0x2c] sm:$0xf]
    %v57 = vld [vmem:[#allocation3 + $0x30] sm:$0xf]
    %v58 = vld [vmem:[#allocation3 + $0x34] sm:$0xf]
    %v59 = vld [vmem:[#allocation3 + $0x38] sm:$0xf]
    %v60 = vld [vmem:[#allocation3 + $0x3c] sm:$0xf]
    %v61 = vld [vmem:[#allocation3 + $0x40] sm:$0xf]
    %v62 = vld [vmem:[#allocation3 + $0x44] sm:$0xf]
    %v63 = vld [vmem:[#allocation3 + $0x48] sm:$0xf]
    %v64 = vld [vmem:[#allocation3 + $0x4c] sm:$0xf]
    %v65 = vld [vmem:[#allocation3 + $0x50] sm:$0xf]
    %v66 = vld [vmem:[#allocation3 + $0x54] sm:$0xf]
    %v67 = vld [vmem:[#allocation3 + $0x58] sm:$0xf]
    %v68 = vld [vmem:[#allocation3 + $0x5c] sm:$0xf]
    %v69 = vld [vmem:[#allocation3 + $0x60] sm:$0xf]
    %v70 = vld [vmem:[#allocation3 + $0x64] sm:$0xf]
    %v71 = vld [vmem:[#allocation3 + $0x68] sm:$0xf]
    %v72 = vld [vmem:[#allocation3 + $0x6c] sm:$0xf]
    %v73 = vld [vmem:[#allocation3 + $0x70] sm:$0xf]
    %v74 = vld [vmem:[#allocation3 + $0x74] sm:$0xf]
    %v75 = vld [vmem:[#allocation3 + $0x78] sm:$0xf]
    %v76 = vld [vmem:[#allocation3 + $0x7c] sm:$0xf]
    %v77 = vld [vmem:[#allocation3 + $0x80] sm:$0xf]
    %v78 = vld [vmem:[#allocation3 + $0x84] sm:$0xf]
    %v79 = vld [vmem:[#allocation3 + $0x88] sm:$0xf]
    %v80 = vld [vmem:[#allocation3 + $0x8c] sm:$0xf]
    %v81 = vld [vmem:[#allocation3 + $0x90] sm:$0xf]
    %v82 = vld [vmem:[#allocation3 + $0x94] sm:$0xf]
    %v83 = vld [vmem:[#allocation3 + $0x98] sm:$0xf]
    %v84 = vld [vmem:[#allocation3 + $0x9c] sm:$0xf]
    %v85 = vld [vmem:[#allocation3 + $0xa0] sm:$0xf]
    %v86 = vld [vmem:[#allocation3 + $0xa4] sm:$0xf]
    %v87 = vld [vmem:[#allocation3 + $0xa8] sm:$0xf]
    %v88 = vld [vmem:[#allocation3 + $0xac] sm:$0xf]
    %v89 = vld [vmem:[#allocation3 + $0xb0] sm:$0xf]
    %v90 = vld [vmem:[#allocation3 + $0xb4] sm:$0xf]
    %v91 = vld [vmem:[#allocation3 + $0xb8] sm:$0xf]
    %v92 = vld [vmem:[#allocation3 + $0xbc] sm:$0xf]
    %v93 = vld [vmem:[#allocation3 + $0xc0] sm:$0xf]
    %v94 = vld [vmem:[#allocation3 + $0xc4] sm:$0xf]
    %v95 = vld [vmem:[#allocation3 + $0xc8] sm:$0xf]
    %v96 = vld [vmem:[#allocation3 + $0xcc] sm:$0xf]
    %v97 = vld [vmem:[#allocation3 + $0xd0] sm:$0xf]
    %v98 = vld [vmem:[#allocation3 + $0xd4] sm:$0xf]
    %v99 = vld [vmem:[#allocation3 + $0xd8] sm:$0xf]
    %v100 = vld [vmem:[#allocation3 + $0xdc] sm:$0xf]
    %v101 = vld [vmem:[#allocation3 + $0xe0] sm:$0xf]
    %v102 = vld [vmem:[#allocation3 + $0xe4] sm:$0xf]
    %v103 = vld [vmem:[#allocation3 + $0xe8] sm:$0xf]
    %v104 = vld [vmem:[#allocation3 + $0xec] sm:$0xf]
    %v105 = vld [vmem:[#allocation3 + $0xf0] sm:$0xf]
    %v106 = vld [vmem:[#allocation3 + $0xf4] sm:$0xf]
    %v107 = vld [vmem:[#allocation3 + $0xf8] sm:$0xf]
    %v108 = vld [vmem:[#allocation3 + $0xfc] sm:$0xf]
    %v109 = vld [vmem:[#allocation3 + $0x100] sm:$0xf]
    %v110 = vld [vmem:[#allocation3 + $0x104] sm:$0xf]
    %v111 = vld [vmem:[#allocation3 + $0x108] sm:$0xf]
    %v112 = vld [vmem:[#allocation3 + $0x10c] sm:$0xf]
    %v113 = vld [vmem:[#allocation3 + $0x110] sm:$0xf]
    %v114 = vld [vmem:[#allocation3 + $0x114] sm:$0xf]
    %v115 = vld [vmem:[#allocation3 + $0x118] sm:$0xf]
    %v116 = vld [vmem:[#allocation3 + $0x11c] sm:$0xf]
    %v117 = vld [vmem:[#allocation3 + $0x120] sm:$0xf]
    %v118 = vld [vmem:[#allocation3 + $0x124] sm:$0xf]
    %v119 = vld [vmem:[#allocation3 + $0x128] sm:$0xf]
    %v120 = vld [vmem:[#allocation3 + $0x12c] sm:$0xf]
    %v121 = vld [vmem:[#allocation3 + $0x130] sm:$0xf]
    %v122 = vld [vmem:[#allocation3 + $0x134] sm:$0xf]
    %v123 = vld [vmem:[#allocation3 + $0x138] sm:$0xf]
    %v124 = vld [vmem:[#allocation3 + $0x13c] sm:$0xf]
    %v125 = vld [vmem:[#allocation3 + $0x140] sm:$0xf]
    %v126 = vld [vmem:[#allocation3 + $0x144] sm:$0xf]
    %v127 = vld [vmem:[#allocation3 + $0x148] sm:$0xf]
    %v128 = vld [vmem:[#allocation3 + $0x14c] sm:$0xf]
    %v129 = vld [vmem:[#allocation3 + $0x150] sm:$0xf]
    %v130 = vld [vmem:[#allocation3 + $0x154] sm:$0xf]
    %v131 = vld [vmem:[#allocation3 + $0x158] sm:$0xf]
    %v132 = vld [vmem:[#allocation3 + $0x15c] sm:$0xf]
    %v133 = vld [vmem:[#allocation3 + $0x160] sm:$0xf]
    %v134 = vld [vmem:[#allocation3 + $0x164] sm:$0xf]
    %v135 = vld [vmem:[#allocation3 + $0x168] sm:$0xf]
    %v136 = vld [vmem:[#allocation3 + $0x16c] sm:$0xf]
    %v137 = vld [vmem:[#allocation3 + $0x170] sm:$0xf]
    %v138 = vld [vmem:[#allocation3 + $0x174] sm:$0xf]
    %v139 = vld [vmem:[#allocation3 + $0x178] sm:$0xf]
    %v140 = vld [vmem:[#allocation3 + $0x17c] sm:$0xf]
    %v141 = vld [vmem:[#allocation3 + $0x180] sm:$0xf]
    %v142 = vld [vmem:[#allocation3 + $0x184] sm:$0xf]
    %v143 = vld [vmem:[#allocation3 + $0x188] sm:$0xf]
    %v144 = vld [vmem:[#allocation3 + $0x18c] sm:$0xf]
    %v145 = vld [vmem:[#allocation3 + $0x190] sm:$0xf]
    %v146 = vld [vmem:[#allocation3 + $0x194] sm:$0xf]
    %v147 = vld [vmem:[#allocation3 + $0x198] sm:$0xf]
    %v148 = vld [vmem:[#allocation3 + $0x19c] sm:$0xf]
    %v149 = vld [vmem:[#allocation3 + $0x1a0] sm:$0xf]
    %v150 = vld [vmem:[#allocation3 + $0x1a4] sm:$0xf]
    %v151 = vld [vmem:[#allocation3 + $0x1a8] sm:$0xf]
    %v152 = vld [vmem:[#allocation3 + $0x1ac] sm:$0xf]
    %v153 = vld [vmem:[#allocation3 + $0x1b0] sm:$0xf]
    %v154 = vld [vmem:[#allocation3 + $0x1b4] sm:$0xf]
    %v155 = vld [vmem:[#allocation3 + $0x1b8] sm:$0xf]
    %v156 = vld [vmem:[#allocation3 + $0x1bc] sm:$0xf]
    %v157 = vld [vmem:[#allocation3 + $0x1c0] sm:$0xf]
    %v158 = vld [vmem:[#allocation3 + $0x1c4] sm:$0xf]
    %v159 = vld [vmem:[#allocation3 + $0x1c8] sm:$0xf]
    %v160 = vld [vmem:[#allocation3 + $0x1cc] sm:$0xf]
    %v161 = vld [vmem:[#allocation3 + $0x1d0] sm:$0xf]
    %v162 = vld [vmem:[#allocation3 + $0x1d4] sm:$0xf]
    %v163 = vld [vmem:[#allocation3 + $0x1d8] sm:$0xf]
    %v164 = vld [vmem:[#allocation3 + $0x1dc] sm:$0xf]
    %v165 = vld [vmem:[#allocation3 + $0x1e0] sm:$0xf]
    %v166 = vld [vmem:[#allocation3 + $0x1e4] sm:$0xf]
    %v167 = vld [vmem:[#allocation3 + $0x1e8] sm:$0xf]
    %v168 = vld [vmem:[#allocation3 + $0x1ec] sm:$0xf]
    %v169 = vld [vmem:[#allocation3 + $0x1f0] sm:$0xf]
    %v170 = vld [vmem:[#allocation3 + $0x1f4] sm:$0xf]
    %v171 = vld [vmem:[#allocation3 + $0x1f8] sm:$0xf]
    %v172 = vld [vmem:[#allocation3 + $0x1fc] sm:$0xf]
    %v181 = vunpack.c.l.b16 %v37
    %v182 = vunpack.c.h.b16 %v37
    %v183 = vunpack.c.l.b16 %v38
    %v184 = vunpack.c.h.b16 %v38
    %v185 = vunpack.c.l.b16 %v39
    %v186 = vunpack.c.h.b16 %v39
    %v187 = vunpack.c.l.b16 %v40
    %v188 = vunpack.c.h.b16 %v40
    %v189 = vunpack.c.l.b16 %v41
    %v190 = vunpack.c.h.b16 %v41
    %v191 = vunpack.c.l.b16 %v42
    %v192 = vunpack.c.h.b16 %v42
    %v193 = vunpack.c.l.b16 %v43
    %v194 = vunpack.c.h.b16 %v43
    %v195 = vunpack.c.l.b16 %v44
    %v196 = vunpack.c.h.b16 %v44
    %v197 = vpack.c.b16 %v189, %v181
    %v198 = vpack.c.b16 %v190, %v182
    %v199 = vpack.c.b16 %v191, %v183
    %v200 = vpack.c.b16 %v192, %v184
    %v201 = vpack.c.b16 %v193, %v185
    %v202 = vpack.c.b16 %v194, %v186
    %v203 = vpack.c.b16 %v195, %v187
    %v204 = vpack.c.b16 %v196, %v188
    %v341 = vunpack.c.l.b16 %v45
    %v342 = vunpack.c.l.b16 %v46
    %v343 = vunpack.c.l.b16 %v47
    %v344 = vunpack.c.l.b16 %v48
    %v345 = vunpack.c.l.b16 %v49
    %v346 = vunpack.c.l.b16 %v50
    %v347 = vunpack.c.l.b16 %v51
    %v348 = vunpack.c.l.b16 %v52
    %v349 = vunpack.c.l.b16 %v53
    %v350 = vunpack.c.l.b16 %v54
    %v351 = vunpack.c.l.b16 %v55
    %v352 = vunpack.c.l.b16 %v56
    %v353 = vunpack.c.l.b16 %v57
    %v354 = vunpack.c.l.b16 %v58
    %v355 = vunpack.c.l.b16 %v59
    %v356 = vunpack.c.l.b16 %v60
    %v357 = vunpack.c.l.b16 %v61
    %v358 = vunpack.c.l.b16 %v62
    %v359 = vunpack.c.l.b16 %v63
    %v360 = vunpack.c.l.b16 %v64
    %v361 = vunpack.c.l.b16 %v65
    %v362 = vunpack.c.l.b16 %v66
    %v363 = vunpack.c.l.b16 %v67
    %v364 = vunpack.c.l.b16 %v68
    %v365 = vunpack.c.l.b16 %v69
    %v366 = vunpack.c.l.b16 %v70
    %v367 = vunpack.c.l.b16 %v71
    %v368 = vunpack.c.l.b16 %v72
    %v369 = vunpack.c.l.b16 %v73
    %v370 = vunpack.c.l.b16 %v74
    %v371 = vunpack.c.l.b16 %v75
    %v372 = vunpack.c.l.b16 %v76
    %v373 = vunpack.c.l.b16 %v77
    %v374 = vunpack.c.l.b16 %v78
    %v375 = vunpack.c.l.b16 %v79
    %v376 = vunpack.c.l.b16 %v80
    %v377 = vunpack.c.l.b16 %v81
    %v378 = vunpack.c.l.b16 %v82
    %v379 = vunpack.c.l.b16 %v83
    %v380 = vunpack.c.l.b16 %v84
    %v381 = vunpack.c.l.b16 %v85
    %v382 = vunpack.c.l.b16 %v86
    %v383 = vunpack.c.l.b16 %v87
    %v384 = vunpack.c.l.b16 %v88
    %v385 = vunpack.c.l.b16 %v89
    %v386 = vunpack.c.l.b16 %v90
    %v387 = vunpack.c.l.b16 %v91
    %v388 = vunpack.c.l.b16 %v92
    %v389 = vunpack.c.l.b16 %v93
    %v390 = vunpack.c.l.b16 %v94
    %v391 = vunpack.c.l.b16 %v95
    %v392 = vunpack.c.l.b16 %v96
    %v393 = vunpack.c.l.b16 %v97
    %v394 = vunpack.c.l.b16 %v98
    %v395 = vunpack.c.l.b16 %v99
    %v396 = vunpack.c.l.b16 %v100
    %v397 = vunpack.c.l.b16 %v101
    %v398 = vunpack.c.l.b16 %v102
    %v399 = vunpack.c.l.b16 %v103
    %v400 = vunpack.c.l.b16 %v104
    %v401 = vunpack.c.l.b16 %v105
    %v402 = vunpack.c.l.b16 %v106
    %v403 = vunpack.c.l.b16 %v107
    %v404 = vunpack.c.l.b16 %v108
    %v405 = vunpack.c.l.b16 %v109
    %v406 = vunpack.c.l.b16 %v110
    %v407 = vunpack.c.l.b16 %v111
    %v408 = vunpack.c.l.b16 %v112
    %v409 = vunpack.c.l.b16 %v113
    %v410 = vunpack.c.l.b16 %v114
    %v411 = vunpack.c.l.b16 %v115
    %v412 = vunpack.c.l.b16 %v116
    %v413 = vunpack.c.l.b16 %v117
    %v414 = vunpack.c.l.b16 %v118
    %v415 = vunpack.c.l.b16 %v119
    %v416 = vunpack.c.l.b16 %v120
    %v417 = vunpack.c.l.b16 %v121
    %v418 = vunpack.c.l.b16 %v122
    %v419 = vunpack.c.l.b16 %v123
    %v420 = vunpack.c.l.b16 %v124
    %v421 = vunpack.c.l.b16 %v125
    %v422 = vunpack.c.l.b16 %v126
    %v423 = vunpack.c.l.b16 %v127
    %v424 = vunpack.c.l.b16 %v128
    %v425 = vunpack.c.l.b16 %v129
    %v426 = vunpack.c.l.b16 %v130
    %v427 = vunpack.c.l.b16 %v131
    %v428 = vunpack.c.l.b16 %v132
    %v429 = vunpack.c.l.b16 %v133
    %v430 = vunpack.c.l.b16 %v134
    %v431 = vunpack.c.l.b16 %v135
    %v432 = vunpack.c.l.b16 %v136
    %v433 = vunpack.c.l.b16 %v137
    %v434 = vunpack.c.l.b16 %v138
    %v435 = vunpack.c.l.b16 %v139
    %v436 = vunpack.c.l.b16 %v140
    %v437 = vunpack.c.l.b16 %v141
    %v438 = vunpack.c.l.b16 %v142
    %v439 = vunpack.c.l.b16 %v143
    %v440 = vunpack.c.l.b16 %v144
    %v441 = vunpack.c.l.b16 %v145
    %v442 = vunpack.c.l.b16 %v146
    %v443 = vunpack.c.l.b16 %v147
    %v444 = vunpack.c.l.b16 %v148
    %v445 = vunpack.c.l.b16 %v149
    %v446 = vunpack.c.l.b16 %v150
    %v447 = vunpack.c.l.b16 %v151
    %v448 = vunpack.c.l.b16 %v152
    %v449 = vunpack.c.l.b16 %v153
    %v450 = vunpack.c.l.b16 %v154
    %v451 = vunpack.c.l.b16 %v155
    %v452 = vunpack.c.l.b16 %v156
    %v453 = vunpack.c.l.b16 %v157
    %v454 = vunpack.c.l.b16 %v158
    %v455 = vunpack.c.l.b16 %v159
    %v456 = vunpack.c.l.b16 %v160
    %v457 = vunpack.c.l.b16 %v161
    %v458 = vunpack.c.l.b16 %v162
    %v459 = vunpack.c.l.b16 %v163
    %v460 = vunpack.c.l.b16 %v164
    %v461 = vunpack.c.l.b16 %v165
    %v462 = vunpack.c.l.b16 %v166
    %v463 = vunpack.c.l.b16 %v167
    %v464 = vunpack.c.l.b16 %v168
    %v465 = vunpack.c.l.b16 %v169
    %v466 = vunpack.c.l.b16 %v170
    %v467 = vunpack.c.l.b16 %v171
    %v468 = vunpack.c.l.b16 %v172
    %v469 = vpack.c.b16 %v342, %v341
    %v470 = vpack.c.b16 %v344, %v343
    %v471 = vpack.c.b16 %v346, %v345
    %v472 = vpack.c.b16 %v348, %v347
    %v473 = vpack.c.b16 %v350, %v349
    %v474 = vpack.c.b16 %v352, %v351
    %v475 = vpack.c.b16 %v354, %v353
    %v476 = vpack.c.b16 %v356, %v355
    %v477 = vpack.c.b16 %v358, %v357
    %v478 = vpack.c.b16 %v360, %v359
    %v479 = vpack.c.b16 %v362, %v361
    %v480 = vpack.c.b16 %v364, %v363
    %v481 = vpack.c.b16 %v366, %v365
    %v482 = vpack.c.b16 %v368, %v367
    %v483 = vpack.c.b16 %v370, %v369
    %v484 = vpack.c.b16 %v372, %v371
    %v485 = vpack.c.b16 %v374, %v373
    %v486 = vpack.c.b16 %v376, %v375
    %v487 = vpack.c.b16 %v378, %v377
    %v488 = vpack.c.b16 %v380, %v379
    %v489 = vpack.c.b16 %v382, %v381
    %v490 = vpack.c.b16 %v384, %v383
    %v491 = vpack.c.b16 %v386, %v385
    %v492 = vpack.c.b16 %v388, %v387
    %v493 = vpack.c.b16 %v390, %v389
    %v494 = vpack.c.b16 %v392, %v391
    %v495 = vpack.c.b16 %v394, %v393
    %v496 = vpack.c.b16 %v396, %v395
    %v497 = vpack.c.b16 %v398, %v397
    %v498 = vpack.c.b16 %v400, %v399
    %v499 = vpack.c.b16 %v402, %v401
    %v500 = vpack.c.b16 %v404, %v403
    %v501 = vpack.c.b16 %v406, %v405
    %v502 = vpack.c.b16 %v408, %v407
    %v503 = vpack.c.b16 %v410, %v409
    %v504 = vpack.c.b16 %v412, %v411
    %v505 = vpack.c.b16 %v414, %v413
    %v506 = vpack.c.b16 %v416, %v415
    %v507 = vpack.c.b16 %v418, %v417
    %v508 = vpack.c.b16 %v420, %v419
    %v509 = vpack.c.b16 %v422, %v421
    %v510 = vpack.c.b16 %v424, %v423
    %v511 = vpack.c.b16 %v426, %v425
    %v512 = vpack.c.b16 %v428, %v427
    %v513 = vpack.c.b16 %v430, %v429
    %v514 = vpack.c.b16 %v432, %v431
    %v515 = vpack.c.b16 %v434, %v433
    %v516 = vpack.c.b16 %v436, %v435
    %v517 = vpack.c.b16 %v438, %v437
    %v518 = vpack.c.b16 %v440, %v439
    %v519 = vpack.c.b16 %v442, %v441
    %v520 = vpack.c.b16 %v444, %v443
    %v521 = vpack.c.b16 %v446, %v445
    %v522 = vpack.c.b16 %v448, %v447
    %v523 = vpack.c.b16 %v450, %v449
    %v524 = vpack.c.b16 %v452, %v451
    %v525 = vpack.c.b16 %v454, %v453
    %v526 = vpack.c.b16 %v456, %v455
    %v527 = vpack.c.b16 %v458, %v457
    %v528 = vpack.c.b16 %v460, %v459
    %v529 = vpack.c.b16 %v462, %v461
    %v530 = vpack.c.b16 %v464, %v463
    %v531 = vpack.c.b16 %v466, %v465
    %v532 = vpack.c.b16 %v468, %v467
    %597 = vmatprep.subr.bf16.mxu0 0
    %598 = vmatpush1.bf16.msra.mxu0 %v469
    %599 = vmatprep.subr.bf16.mxu0 0
    %600 = vmatpush1.bf16.msra.mxu0 %v470
    %601 = vmatprep.subr.bf16.mxu0 0
    %602 = vmatpush1.bf16.msra.mxu0 %v471
    %603 = vmatprep.subr.bf16.mxu0 0
    %604 = vmatpush1.bf16.msra.mxu0 %v472
    %605 = vmatprep.subr.bf16.mxu0 0
    %606 = vmatpush1.bf16.msra.mxu0 %v473
    %607 = vmatprep.subr.bf16.mxu0 0
    %608 = vmatpush1.bf16.msra.mxu0 %v474
    %609 = vmatprep.subr.bf16.mxu0 0
    %610 = vmatpush1.bf16.msra.mxu0 %v475
    %611 = vmatprep.subr.bf16.mxu0 0
    %612 = vmatpush1.bf16.msra.mxu0 %v476
    %613 = vmatprep.subr.bf16.mxu0 0
    %614 = vmatpush1.bf16.msra.mxu0 %v477
    %615 = vmatprep.subr.bf16.mxu0 0
    %616 = vmatpush1.bf16.msra.mxu0 %v478
    %617 = vmatprep.subr.bf16.mxu0 0
    %618 = vmatpush1.bf16.msra.mxu0 %v479
    %619 = vmatprep.subr.bf16.mxu0 0
    %620 = vmatpush1.bf16.msra.mxu0 %v480
    %621 = vmatprep.subr.bf16.mxu0 0
    %622 = vmatpush1.bf16.msra.mxu0 %v481
    %623 = vmatprep.subr.bf16.mxu0 0
    %624 = vmatpush1.bf16.msra.mxu0 %v482
    %625 = vmatprep.subr.bf16.mxu0 0
    %626 = vmatpush1.bf16.msra.mxu0 %v483
    %627 = vmatprep.subr.bf16.mxu0 0
    %628 = vmatpush1.bf16.msra.mxu0 %v484
    %629 = vmatprep.mubr.bf16.mxu0 %v198
    %630 = vmatmul.mubr.bf16.gmra.mrb[0].mxu0 %v197
    %v631 = vpop.f32.mrb[0].mxu0
    %v632 = vadd.f32 0.0, %v631
    %v633 = vpop.f32.mrb[0].mxu0
    %v634 = vpop.f32.mrb[0].mxu0
    %v635 = vadd.f32 0.0, %v634
    %v636 = vpop.f32.mrb[0].mxu0
    %637 = vdwg.mxu0
    %638 = vmatprep.subr.bf16.mxu0 0
    %639 = vmatpush1.bf16.msra.mxu0 %v485
    %640 = vmatprep.subr.bf16.mxu0 0
    %641 = vmatpush1.bf16.msra.mxu0 %v486
    %642 = vmatprep.subr.bf16.mxu0 0
    %643 = vmatpush1.bf16.msra.mxu0 %v487
    %644 = vmatprep.subr.bf16.mxu0 0
    %645 = vmatpush1.bf16.msra.mxu0 %v488
    %646 = vmatprep.subr.bf16.mxu0 0
    %647 = vmatpush1.bf16.msra.mxu0 %v489
    %648 = vmatprep.subr.bf16.mxu0 0
    %649 = vmatpush1.bf16.msra.mxu0 %v490
    %650 = vmatprep.subr.bf16.mxu0 0
    %651 = vmatpush1.bf16.msra.mxu0 %v491
    %652 = vmatprep.subr.bf16.mxu0 0
    %653 = vmatpush1.bf16.msra.mxu0 %v492
    %654 = vmatprep.subr.bf16.mxu0 0
    %655 = vmatpush1.bf16.msra.mxu0 %v493
    %656 = vmatprep.subr.bf16.mxu0 0
    %657 = vmatpush1.bf16.msra.mxu0 %v494
    %658 = vmatprep.subr.bf16.mxu0 0
    %659 = vmatpush1.bf16.msra.mxu0 %v495
    %660 = vmatprep.subr.bf16.mxu0 0
    %661 = vmatpush1.bf16.msra.mxu0 %v496
    %662 = vmatprep.subr.bf16.mxu0 0
    %663 = vmatpush1.bf16.msra.mxu0 %v497
    %664 = vmatprep.subr.bf16.mxu0 0
    %665 = vmatpush1.bf16.msra.mxu0 %v498
    %666 = vmatprep.subr.bf16.mxu0 0
    %667 = vmatpush1.bf16.msra.mxu0 %v499
    %668 = vmatprep.subr.bf16.mxu0 0
    %669 = vmatpush1.bf16.msra.mxu0 %v500
    %670 = vmatprep.mubr.bf16.mxu0 %v200
    %671 = vmatmul.mubr.bf16.gmra.mrb[0].mxu0 %v199
    %v672 = vpop.f32.mrb[0].mxu0
    %v673 = vadd.f32 %v632, %v672
    %v674 = vpop.f32.mrb[0].mxu0
    %v675 = vpop.f32.mrb[0].mxu0
    %v676 = vadd.f32 %v635, %v675
    %v677 = vpop.f32.mrb[0].mxu0
    %678 = vdwg.mxu0
    %679 = vmatprep.subr.bf16.mxu0 0
    %680 = vmatpush1.bf16.msra.mxu0 %v501
    %681 = vmatprep.subr.bf16.mxu0 0
    %682 = vmatpush1.bf16.msra.mxu0 %v502
    %683 = vmatprep.subr.bf16.mxu0 0
    %684 = vmatpush1.bf16.msra.mxu0 %v503
    %685 = vmatprep.subr.bf16.mxu0 0
    %686 = vmatpush1.bf16.msra.mxu0 %v504
    %687 = vmatprep.subr.bf16.mxu0 0
    %688 = vmatpush1.bf16.msra.mxu0 %v505
    %689 = vmatprep.subr.bf16.mxu0 0
    %690 = vmatpush1.bf16.msra.mxu0 %v506
    %691 = vmatprep.subr.bf16.mxu0 0
    %692 = vmatpush1.bf16.msra.mxu0 %v507
    %693 = vmatprep.subr.bf16.mxu0 0
    %694 = vmatpush1.bf16.msra.mxu0 %v508
    %695 = vmatprep.subr.bf16.mxu0 0
    %696 = vmatpush1.bf16.msra.mxu0 %v509
    %697 = vmatprep.subr.bf16.mxu0 0
    %698 = vmatpush1.bf16.msra.mxu0 %v510
    %699 = vmatprep.subr.bf16.mxu0 0
    %700 = vmatpush1.bf16.msra.mxu0 %v511
    %701 = vmatprep.subr.bf16.mxu0 0
    %702 = vmatpush1.bf16.msra.mxu0 %v512
    %703 = vmatprep.subr.bf16.mxu0 0
    %704 = vmatpush1.bf16.msra.mxu0 %v513
    %705 = vmatprep.subr.bf16.mxu0 0
    %706 = vmatpush1.bf16.msra.mxu0 %v514
    %707 = vmatprep.subr.bf16.mxu0 0
    %708 = vmatpush1.bf16.msra.mxu0 %v515
    %709 = vmatprep.subr.bf16.mxu0 0
    %710 = vmatpush1.bf16.msra.mxu0 %v516
    %711 = vmatprep.mubr.bf16.mxu0 %v202
    %712 = vmatmul.mubr.bf16.gmra.mrb[0].mxu0 %v201
    %v713 = vpop.f32.mrb[0].mxu0
    %v714 = vadd.f32 %v673, %v713
    %v715 = vpop.f32.mrb[0].mxu0
    %v716 = vpop.f32.mrb[0].mxu0
    %v717 = vadd.f32 %v676, %v716
    %v718 = vpop.f32.mrb[0].mxu0
    %719 = vdwg.mxu0
    %720 = vmatprep.subr.bf16.mxu0 0
    %721 = vmatpush1.bf16.msra.mxu0 %v517
    %722 = vmatprep.subr.bf16.mxu0 0
    %723 = vmatpush1.bf16.msra.mxu0 %v518
    %724 = vmatprep.subr.bf16.mxu0 0
    %725 = vmatpush1.bf16.msra.mxu0 %v519
    %726 = vmatprep.subr.bf16.mxu0 0
    %727 = vmatpush1.bf16.msra.mxu0 %v520
    %728 = vmatprep.subr.bf16.mxu0 0
    %729 = vmatpush1.bf16.msra.mxu0 %v521
    %730 = vmatprep.subr.bf16.mxu0 0
    %731 = vmatpush1.bf16.msra.mxu0 %v522
    %732 = vmatprep.subr.bf16.mxu0 0
    %733 = vmatpush1.bf16.msra.mxu0 %v523
    %734 = vmatprep.subr.bf16.mxu0 0
    %735 = vmatpush1.bf16.msra.mxu0 %v524
    %736 = vmatprep.subr.bf16.mxu0 0
    %737 = vmatpush1.bf16.msra.mxu0 %v525
    %738 = vmatprep.subr.bf16.mxu0 0
    %739 = vmatpush1.bf16.msra.mxu0 %v526
    %740 = vmatprep.subr.bf16.mxu0 0
    %741 = vmatpush1.bf16.msra.mxu0 %v527
    %742 = vmatprep.subr.bf16.mxu0 0
    %743 = vmatpush1.bf16.msra.mxu0 %v528
    %744 = vmatprep.subr.bf16.mxu0 0
    %745 = vmatpush1.bf16.msra.mxu0 %v529
    %746 = vmatprep.subr.bf16.mxu0 0
    %747 = vmatpush1.bf16.msra.mxu0 %v530
    %748 = vmatprep.subr.bf16.mxu0 0
    %749 = vmatpush1.bf16.msra.mxu0 %v531
    %750 = vmatprep.subr.bf16.mxu0 0
    %751 = vmatpush1.bf16.msra.mxu0 %v532
    %752 = vmatprep.mubr.bf16.mxu0 %v204
    %753 = vmatmul.mubr.bf16.gmra.mrb[0].mxu0 %v203
    %v754 = vpop.f32.mrb[0].mxu0
    %v755 = vadd.f32 %v714, %v754
    %v756 = vpop.f32.mrb[0].mxu0
    %v757 = vpop.f32.mrb[0].mxu0
    %v758 = vadd.f32 %v717, %v757
    %v759 = vpop.f32.mrb[0].mxu0
    %760 = vdwg.mxu0
    %p761 = scmp.eq.s32.totalorder 0, 0
    // Predicated region
    $region26: #{_lambda_.1} parent=1 // pred_check
      %p762 = pneg %p761
    $region27: #{_lambda_.1} parent=1 // pred_check_branch
      %764 = sbr.rel (%p762) target = $region29
    $region28: #{_lambda_.1} parent=1 // pred_region
      %765 = vst [vmem:[#allocation2] sm:$0xff] %v755
      %766 = vst [vmem:[#allocation2 + $0x8] sm:$0xff] %v758
    $region29: #{_lambda_.1} parent=1 // pred_fallthru
      _
    %p767 = scmp.gt.s32.totalorder 0, 0
    // Predicated region
    $region30: #{_lambda_.1} parent=1 // pred_check
      %p768 = pneg %p767
    $region31: #{_lambda_.1} parent=1 // pred_check_branch
      %770 = sbr.rel (%p768) target = $region33
    $region32: #{_lambda_.1} parent=1 // pred_region
      %v771 = vld [vmem:[#allocation2] sm:$0xff]
      %v772 = vld [vmem:[#allocation2 + $0x8] sm:$0xff]
      %v773 = vadd.f32 %v771, %v755
      %v774 = vadd.f32 %v772, %v758
      %775 = vst [vmem:[#allocation2] sm:$0xff] %v773
      %776 = vst [vmem:[#allocation2 + $0x8] sm:$0xff] %v774
    $region33: #{_lambda_.1} parent=1 // pred_fallthru
      _
    // Predicated region
    $region34: #{_lambda_.1} parent=1 // pred_check
      %p777 = pneg %p761
    $region35: #{_lambda_.1} parent=1 // pred_check_branch
      %779 = sbr.rel (%p777) target = $region37
    $region36: #{_lambda_.1} parent=1 // pred_region
      %v780 = vld [vmem:[#allocation2] sm:$0xff]
      %v781 = vld [vmem:[#allocation2 + $0x8] sm:$0xff]
      %v782 = vld [vmem:[%s2] sm:$0x1]
      %v784 = vlaneseq
      %v785 = vshrl.u32 %v784, 7
      %v786 = vsub.s32 0, %v785
      %v787 = vrot.slane %v782, %v786
      %v789 = vadd.f32 %v780, %v787
      %v790 = vadd.f32 %v781, %v787
      %791 = vst [vmem:[%s5] sm:$0xff] %v789
      %792 = vst [vmem:[%s5 + $0x8] sm:$0xff] %v790
      %v793 = vpack.c.bf16 %v790, %v789
      %v794 = vld [vmem:[%s3] sm:$0xf]
      %v795 = vld [vmem:[%s3 + $0x4] sm:$0xf]
      %v796 = vld [vmem:[%s3 + $0x8] sm:$0xf]
      %v797 = vld [vmem:[%s3 + $0xc] sm:$0xf]
      %v798 = vld [vmem:[%s3 + $0x10] sm:$0xf]
      %v799 = vld [vmem:[%s3 + $0x14] sm:$0xf]
      %v800 = vld [vmem:[%s3 + $0x18] sm:$0xf]
      %v801 = vld [vmem:[%s3 + $0x1c] sm:$0xf]
      %v802 = vld [vmem:[%s3 + $0x20] sm:$0xf]
      %v803 = vld [vmem:[%s3 + $0x24] sm:$0xf]
      %v804 = vld [vmem:[%s3 + $0x28] sm:$0xf]
      %v805 = vld [vmem:[%s3 + $0x2c] sm:$0xf]
      %v806 = vld [vmem:[%s3 + $0x30] sm:$0xf]
      %v807 = vld [vmem:[%s3 + $0x34] sm:$0xf]
      %v808 = vld [vmem:[%s3 + $0x38] sm:$0xf]
      %v809 = vld [vmem:[%s3 + $0x3c] sm:$0xf]
      %v810 = vld [vmem:[%s4] sm:$0x1]
      %v812 = vlaneseq
      %v813 = vshrl.u32 %v812, 7
      %v814 = vsub.s32 0, %v813
      %v815 = vrot.slane %v810, %v814
      %v833 = vunpack.c.l.b16 %v794
      %v834 = vunpack.c.l.b16 %v795
      %v835 = vunpack.c.l.b16 %v796
      %v836 = vunpack.c.l.b16 %v797
      %v837 = vunpack.c.l.b16 %v798
      %v838 = vunpack.c.l.b16 %v799
      %v839 = vunpack.c.l.b16 %v800
      %v840 = vunpack.c.l.b16 %v801
      %v841 = vunpack.c.l.b16 %v802
      %v842 = vunpack.c.l.b16 %v803
      %v843 = vunpack.c.l.b16 %v804
      %v844 = vunpack.c.l.b16 %v805
      %v845 = vunpack.c.l.b16 %v806
      %v846 = vunpack.c.l.b16 %v807
      %v847 = vunpack.c.l.b16 %v808
      %v848 = vunpack.c.l.b16 %v809
      %v849 = vpack.c.b16 %v834, %v833
      %v850 = vpack.c.b16 %v836, %v835
      %v851 = vpack.c.b16 %v838, %v837
      %v852 = vpack.c.b16 %v840, %v839
      %v853 = vpack.c.b16 %v842, %v841
      %v854 = vpack.c.b16 %v844, %v843
      %v855 = vpack.c.b16 %v846, %v845
      %v856 = vpack.c.b16 %v848, %v847
      %865 = vmatprep.subr.bf16.mxu0 0
      %866 = vmatpush1.bf16.msra.mxu0 %v849
      %867 = vmatprep.subr.bf16.mxu0 0
      %868 = vmatpush1.bf16.msra.mxu0 %v850
      %869 = vmatprep.subr.bf16.mxu0 0
      %870 = vmatpush1.bf16.msra.mxu0 %v851
      %871 = vmatprep.subr.bf16.mxu0 0
      %872 = vmatpush1.bf16.msra.mxu0 %v852
      %873 = vmatprep.subr.bf16.mxu0 0
      %874 = vmatpush1.bf16.msra.mxu0 %v853
      %875 = vmatprep.subr.bf16.mxu0 0
      %876 = vmatpush1.bf16.msra.mxu0 %v854
      %877 = vmatprep.subr.bf16.mxu0 0
      %878 = vmatpush1.bf16.msra.mxu0 %v855
      %879 = vmatprep.subr.bf16.mxu0 0
      %880 = vmatpush1.bf16.msra.mxu0 %v856
      %881 = vmatprep.subr.bf16.mxu0 0
      %882 = vmatpush1.bf16.msra.mxu0 0
      %883 = vmatprep.subr.bf16.mxu0 0
      %884 = vmatpush1.bf16.msra.mxu0 0
      %885 = vmatprep.subr.bf16.mxu0 0
      %886 = vmatpush1.bf16.msra.mxu0 0
      %887 = vmatprep.subr.bf16.mxu0 0
      %888 = vmatpush1.bf16.msra.mxu0 0
      %889 = vmatprep.subr.bf16.mxu0 0
      %890 = vmatpush1.bf16.msra.mxu0 0
      %891 = vmatprep.subr.bf16.mxu0 0
      %892 = vmatpush1.bf16.msra.mxu0 0
      %893 = vmatprep.subr.bf16.mxu0 0
      %894 = vmatpush1.bf16.msra.mxu0 0
      %895 = vmatprep.subr.bf16.mxu0 0
      %896 = vmatpush1.bf16.msra.mxu0 0
      %897 = vmatprep.mubr.bf16.mxu0 0
      %898 = vmatmul.mubr.bf16.gmra.mrb[0].mxu0 %v793
      %v899 = vpop.f32.mrb[0].mxu0
      %v900 = vadd.f32 %v815, %v899
      %v901 = vpop.f32.mrb[0].mxu0
      %v902 = vpop.f32.mrb[0].mxu0
      %v903 = vadd.f32 %v815, %v902
      %v904 = vpop.f32.mrb[0].mxu0
      %905 = vdwg.mxu0
      %906 = vst [vmem:[%s6] sm:$0xff] %v900
      %907 = vst [vmem:[%s6 + $0x8] sm:$0xff] %v903
    $region37: #{_lambda_.1} parent=1 // pred_fallthru
      _
    // Predicated region
    $region38: #{_lambda_.1} parent=1 // pred_check
      _
    $region39: #{_lambda_.1} parent=1 // pred_check_branch
      %909 = sbr.rel (0) target = $region41
    $region40: #{_lambda_.1} parent=1 // pred_region
      _
    $region41: #{_lambda_.1} parent=1 // pred_fallthru
      _
    // Predicated region
    $region42: #{_lambda_.1} parent=1 // pred_check
      _
    $region43: #{_lambda_.1} parent=1 // pred_check_branch
      %911 = sbr.rel (0) target = $region45
    $region44: #{_lambda_.1} parent=1 // pred_region
      _
    $region45: #{_lambda_.1} parent=1 // pred_fallthru
      _
    // Predicated region
    $region46: #{_lambda_.1} parent=1 // pred_check
      _
    $region47: #{_lambda_.1} parent=1 // pred_check_branch
      %913 = sbr.rel (0) target = $region49
    $region48: #{_lambda_.1} parent=1 // pred_region
      _
    $region49: #{_lambda_.1} parent=1 // pred_fallthru
      _
    // Predicated region
    $region50: #{_lambda_.1} parent=1 // pred_check
      _
    $region51: #{_lambda_.1} parent=1 // pred_check_branch
      %915 = sbr.rel (0) target = $region53
    $region52: #{_lambda_.1} parent=1 // pred_region
      _
    $region53: #{_lambda_.1} parent=1 // pred_fallthru
      _
    %916 = vsyncpa [#allocation4], 1

</llo_original>
